<compile_context>
chip_gen: v7x
topology: tpu7x:2x2x1
jax: 0.10.0
libtpu: 0.0.40
codegen_flags: <defaults>
</compile_context>

<pallas_src>
import functools

import jax
import jax.numpy as jnp
import numpy as np
from jax.experimental import pallas as pl
from jax.experimental.pallas import tpu as pltpu


def _masked_mul_kernel(keep_ref, x_ref, o_ref):
    # keep_ref: (rows_tile, 1)       per-channel keep (0.0 / 1.0), lane-broadcast
    # x_ref/o_ref: (rows_tile, spatial_tile)
    o_ref[...] = x_ref[...] * keep_ref[...]


def _sublane(itemsize):
    # dtype-aware sublane packing: f32 -> 8, bf16/f16 -> 16, int8/fp8 -> 32
    return {1: 32, 2: 16, 4: 8}.get(itemsize, 8)


def _choose_tiles(num_rows, spatial, itemsize, target_bytes=6 * 1024 * 1024):
    """Pick (rows_tile, spatial_tile) blocks of ~target_bytes each.

    Respects the (8,128) BlockSpec rule (sublane multiples or full extent,
    128-lane multiples or full extent) and guarantees >=2 grid steps when the
    input is big enough, so v7x's two TensorCores both get work.
    """
    sub = _sublane(itemsize)
    lane = 128

    # Spatial (lane) axis: full extent unless a single sublane-group of rows
    # would already exceed the target tile; then block in 128-lane multiples.
    if spatial * itemsize * sub <= target_bytes or spatial < lane:
        spatial_tile = spatial
    else:
        spatial_tile = (target_bytes // (sub * itemsize)) // lane * lane
        spatial_tile = int(max(lane, min(spatial_tile, (spatial // lane) * lane)))

    # Row (sublane) axis.
    if num_rows <= sub:
        rows_tile = num_rows  # full extent is always legal
    else:
        rows = target_bytes // max(1, spatial_tile * itemsize)
        rows = max(sub, min(rows, num_rows))
        rows = (rows // sub) * sub
        rows_tile = num_rows if rows >= num_rows else rows

    # Ensure >=2 grid steps (megacore sharding on v7x) when legally possible.
    steps = pl.cdiv(num_rows, rows_tile) * pl.cdiv(spatial, spatial_tile)
    if steps < 2 and num_rows > sub:
        half = ((num_rows + 1) // 2) // sub * sub
        rows_tile = max(sub, half)

    return int(rows_tile), int(spatial_tile)


@functools.partial(
    jax.jit, static_argnames=("p", "training", "min_pallas_bytes", "donate_x")
)
def random_dropout(x, key, p=0.5, training=True, min_pallas_bytes=1 << 20,
                   donate_x=False):
    """Pallas implementation of RandomDropout.forward for NCHW inputs."""
    if (not training) or p == 0.0:
        return x

    k_theta, k_mask = jax.random.split(key)
    # theta = torch.Tensor(1).uniform_(0, self.p)[0]
    theta = jax.random.uniform(k_theta, (), jnp.float32, minval=0.0, maxval=p)

    N, C = x.shape[0], x.shape[1]
    spatial = int(np.prod(x.shape[2:])) if x.ndim > 2 else 1
    num_rows = N * C
    itemsize = x.dtype.itemsize

    # One Bernoulli draw per (n, c): drop with probability theta, keep otherwise.
    u = jax.random.uniform(k_mask, (num_rows, 1), jnp.float32)
    keep = (u >= theta).astype(x.dtype)  # 1.0 keep, 0.0 drop (no rescaling)

    x2 = x.reshape(num_rows, spatial)  # lane-dense flattening (contiguous, free)

    total_bytes = num_rows * spatial * itemsize
    if spatial < 128 or total_bytes < min_pallas_bytes:
        # Lane-sparse outputs (spatial < 128) would force masked partial stores;
        # tiny tensors are dominated by launch/pipeline overhead -> fused XLA wins.
        return (x2 * keep).reshape(x.shape)

    rows_tile, spatial_tile = _choose_tiles(num_rows, spatial, itemsize)
    grid = (pl.cdiv(num_rows, rows_tile), pl.cdiv(spatial, spatial_tile))

    out_bytes = num_rows * spatial * itemsize
    cost = pl.CostEstimate(
        flops=num_rows * spatial,
        transcendentals=0,
        bytes_accessed=2 * out_bytes + num_rows * itemsize,
    )

    out = pl.pallas_call(
        _masked_mul_kernel,
        out_shape=jax.ShapeDtypeStruct((num_rows, spatial), x.dtype),
        grid=grid,
        in_specs=[
            pl.BlockSpec((rows_tile, 1), lambda i, j: (i, 0)),             # keep
            pl.BlockSpec((rows_tile, spatial_tile), lambda i, j: (i, j)),  # x
        ],
        out_specs=pl.BlockSpec((rows_tile, spatial_tile), lambda i, j: (i, j)),
        compiler_params=pltpu.CompilerParams(
            dimension_semantics=("parallel", "parallel"),
            vmem_limit_bytes=48 * 1024 * 1024,
        ),
        cost_estimate=cost,
        input_output_aliases=({1: 0} if donate_x else {}),
    )(keep, x2)

    return out.reshape(x.shape)


def _check_channelwise(x, y):
    """Every (n, c) channel must be either kept verbatim or fully zeroed."""
    assert y.shape == x.shape and y.dtype == x.dtype
    xn, yn = np.asarray(x), np.asarray(y)
    N, C = xn.shape[0], xn.shape[1]
    for n in range(N):
        for c in range(C):
            kept = np.allclose(yn[n, c], xn[n, c])
            dropped = np.allclose(yn[n, c], 0.0)
            assert kept or dropped, f"channel ({n},{c}) neither kept nor dropped"


if __name__ == "__main__":
    key = jax.random.PRNGKey(0)
    k_x1, k_x2, k_drop = jax.random.split(key, 3)

    # Small pointnet-style feature tensor (N, C, H, W).  min_pallas_bytes=0
    # forces the Pallas path even at this tiny size so the kernel is exercised.
    N, C, H, W = 2, 4, 16, 16
    x = jax.random.normal(k_x1, (N, C, H, W), jnp.float32)
    y = jax.block_until_ready(
        random_dropout(x, k_drop, p=0.5, training=True, min_pallas_bytes=0)
    )
    _check_channelwise(x, y)

    # A slightly larger shape that exercises the multi-step grid
    # (>=2 row blocks -> both v7x TensorCores would participate).
    x_big = jax.random.normal(k_x2, (2, 16, 16, 16), jnp.float32)
    y_big = jax.block_until_ready(
        random_dropout(x_big, k_drop, p=0.5, training=True, min_pallas_bytes=0)
    )
    _check_channelwise(x_big, y_big)

    # Default call path (tiny input -> fused XLA fallback) for completeness.
    y_fb = jax.block_until_ready(random_dropout(x, k_drop, p=0.5, training=True))
    _check_channelwise(x, y_fb)

    print("KERNEL_OK")
</pallas_src>

<mosaic_0001>
module attributes {stable_mosaic.version = 11 : i64} {
  func.func @_masked_mul_kernel(%arg0: i32, %arg1: i32, %arg2: memref<8x1xf32, #tpu.memory_space<vmem>>, %arg3: memref<8x256xf32, #tpu.memory_space<vmem>>, %arg4: memref<8x256xf32, #tpu.memory_space<vmem>>) attributes {dimension_semantics = [#tpu.dimension_semantics<parallel>, #tpu.dimension_semantics<parallel>], iteration_bounds = array<i64: 1, 1>, scalar_prefetch = 0 : i64, scratch_operands = 0 : i64, tpu.core_type = #tpu.core_type<tc>, window_params = [{transform_indices = @transform_0, window_bounds = array<i64: 8, 1>}, {transform_indices = @transform_1, window_bounds = array<i64: 8, 256>}, {transform_indices = @transform_2, window_bounds = array<i64: 8, 256>}]} {
    %c0 = arith.constant 0 : index
    %c0_0 = arith.constant 0 : index
    %0 = vector.load %arg3[%c0, %c0_0] : memref<8x256xf32, #tpu.memory_space<vmem>>, vector<8x256xf32>
    %c0_1 = arith.constant 0 : index
    %c0_2 = arith.constant 0 : index
    %1 = vector.load %arg2[%c0_1, %c0_2] : memref<8x1xf32, #tpu.memory_space<vmem>>, vector<8x1xf32>
    %2 = vector.broadcast %1 : vector<8x1xf32> to vector<8x256xf32>
    %3 = arith.mulf %0, %2 : vector<8x256xf32>
    %c0_3 = arith.constant 0 : index
    %c0_4 = arith.constant 0 : index
    %4 = vector.load %arg4[%c0_3, %c0_4] : memref<8x256xf32, #tpu.memory_space<vmem>>, vector<8x256xf32>
    tpu.vector_store %arg4[%c0_3, %c0_4], %3 {strides = array<i32>} : memref<8x256xf32, #tpu.memory_space<vmem>>, vector<8x256xf32>,
    return
  }
  func.func @transform_0(%arg0: i32, %arg1: i32) -> (i32, i32) {
    %c0_i32 = arith.constant 0 : i32
    %c0_i32_0 = arith.constant 0 : i32
    return %arg0, %c0_i32 : i32, i32
  }
  func.func @transform_1(%arg0: i32, %arg1: i32) -> (i32, i32) {
    %c0_i32 = arith.constant 0 : i32
    return %arg0, %arg1 : i32, i32
  }
  func.func @transform_2(%arg0: i32, %arg1: i32) -> (i32, i32) {
    %c0_i32 = arith.constant 0 : i32
    return %arg0, %arg1 : i32, i32
  }
}

</mosaic_0001>

<llo_original>
// kernel: random_dropout.3
$region0: #{random_dropout.3}
  #allocation0 [shape = 'u32[]', space=smem, size = 0x4, offset = 0x4, fixed_abs, tag = 'smem constant byte address 0x4 - core index']
  #allocation1 [shape = 'u32[144,128]{1,0:T(1,128)}', space=vmem, size = 0x12000, scoped, tag = 'internal scratch']
  %s0 = inlined_call_operand.vmem [shape: f32[8,1], index: 0, kind: input, shape index: {}]
  %s1 = inlined_call_operand.vmem [shape: f32[8,256], index: 1, kind: input, shape index: {}]
  %s2 = inlined_call_operand.vmem [shape: f32[8,256], index: 2, kind: output, shape index: {}]
  %s3 = sld [smem:[#allocation0]]
  $region18: #{random_dropout.3} parent=0
    _
  %s5 = ssub.s32 1, %s3
  %s6 = scalar_select 0, %s5, %s3
  // Predicated region
  $region2: #{random_dropout.3} parent=0 // pred_check
    _
  $region3: #{random_dropout.3} parent=0 // pred_check_branch
    %8 = sbr.rel (0) target = $region5
  $region4: #{random_dropout.3} parent=0 // pred_region
    _
  $region5: #{random_dropout.3} parent=0 // pred_fallthru
    _
  // Predicated region
  $region6: #{random_dropout.3} parent=0 // pred_check
    _
  $region7: #{random_dropout.3} parent=0 // pred_check_branch
    %10 = sbr.rel (0) target = $region9
  $region8: #{random_dropout.3} parent=0 // pred_region
    _
  $region9: #{random_dropout.3} parent=0 // pred_fallthru
    _
  %v11 = vld [vmem:[%s1] sm:$0xff]
  %v12 = vld [vmem:[%s1 + $0x8] sm:$0xff]
  %v13 = vld [vmem:[%s0] sm:$0xff]
  %15 = vset.pattern.permute.xlu0 0
  %16 = vperm.xlu0 %15, %v13
  %v17 = vpop.permute.xlu0 %16
  %v19 = vmul.f32 %v11, %v17
  %v20 = vmul.f32 %v12, %v17
  %21 = vst [vmem:[%s2] sm:$0xff] %v19
  %22 = vst [vmem:[%s2 + $0x8] sm:$0xff] %v20
  // Predicated region
  $region10: #{random_dropout.3} parent=0 // pred_check
    _
  $region11: #{random_dropout.3} parent=0 // pred_check_branch
    %24 = sbr.rel (0) target = $region13
  $region12: #{random_dropout.3} parent=0 // pred_region
    _
  $region13: #{random_dropout.3} parent=0 // pred_fallthru
    _
  // Predicated region
  $region14: #{random_dropout.3} parent=0 // pred_check
    _
  $region15: #{random_dropout.3} parent=0 // pred_check_branch
    %26 = sbr.rel (0) target = $region17
  $region16: #{random_dropout.3} parent=0 // pred_region
    _
  $region17: #{random_dropout.3} parent=0 // pred_fallthru
    _

</llo_original>
